<compile_context>
chip_gen: v7x
topology: tpu7x:2x2x1
jax: 0.10.0
libtpu: 0.0.40
codegen_flags: <defaults>
</compile_context>

<pallas_src>
import functools
import math

import jax
import jax.numpy as jnp
from jax.experimental import pallas as pl
from jax.experimental.pallas import tpu as pltpu

LANE = 128


def _round_up(x, m):
    return (x + m - 1) // m * m


# ----------------------------- Pallas kernel ----------------------------- #
def _make_textcnn_kernel(tb, lc, kc, nfp):
    def kernel(x_ref, wconv_ref, biasmask_ref, wdense_ref, bdense_ref, out_ref):
        # (tb, lc, kc) -> (tb*lc, kc): leading-dim reshape, lane layout unchanged.
        x = x_ref[...].reshape(tb * lc, kc)
        # One lane-dense MXU pass (K = kc = kpad*E, a multiple of 128) computes every tap
        # of every filter bank of every branch at once.
        conv = jnp.dot(x, wconv_ref[...],
                       preferred_element_type=jnp.float32)            # (tb*lc, nfp) f32
        # Conv bias + validity mask folded into one additive term: bias at valid
        # positions, -1e9 at invalid ones -> ReLU forces invalid slots to 0, which never
        # wins the max because ReLU output at valid positions is >= 0.
        act = jnp.maximum(conv.reshape(tb, lc, nfp)
                          + biasmask_ref[...][None, :, :], 0.0)        # (tb, lc, nfp) f32
        pooled = jnp.max(act, axis=1)                                  # == AdaptiveMaxPool1d(1)
        # TODO(synk): dropout is identity in eval mode; training-mode dropout not implemented.
        out = jnp.dot(pooled, wdense_ref[...],
                      preferred_element_type=jnp.float32) + bdense_ref[...]
        out_ref[...] = out                                             # (tb, 128) f32, lane-dense
    return kernel


# ----------------------- one-time parameter packing ----------------------- #
def pack_textcnn_params(emb_table, conv_ws, conv_bs, dense_w, dense_b,
                        kernel_sizes, seq_len):
    """Build fused/padded kernel parameters ONCE (outside the per-call hot path)."""
    E = emb_table.shape[1]
    F = conv_ws[0].shape[0]
    n = len(kernel_sizes)
    nf = n * F
    O = dense_w.shape[0]
    L = seq_len
    kmin = min(kernel_sizes)
    kmax = max(kernel_sizes)
    assert nf <= LANE and O <= LANE, "filter / output width must fit one lane slab"

    # Pad the tap count so the im2col contraction kpad*E is a multiple of 128
    # (E=32, kmax=5 -> kpad=8 -> K=256: one full 256-deep MXU pass on v6e/v7x,
    # two full 128-deep passes on v5e).
    tap_step = LANE // math.gcd(E, LANE)
    kpad = _round_up(kmax, tap_step)
    lc = _round_up(L - kmin + 1, 8)        # conv output positions computed per block

    # Fused conv weight (kpad*E, 128): rows [dk*E:(dk+1)*E] = tap dk,
    # cols [i*F:(i+1)*F] = branch i, zeros elsewhere (incl. padded taps / lanes).
    w_fused = jnp.zeros((kpad * E, LANE), jnp.float32)
    bias_lane = jnp.zeros((LANE,), jnp.float32)
    valid_len = jnp.zeros((LANE,), jnp.int32)
    for i, (k, w, b) in enumerate(zip(kernel_sizes, conv_ws, conv_bs)):
        wt = jnp.transpose(w, (2, 1, 0)).reshape(k * E, F)            # (F,E,k) -> (k*E,F)
        w_fused = w_fused.at[:k * E, i * F:(i + 1) * F].set(wt)
        bias_lane = bias_lane.at[i * F:(i + 1) * F].set(b)
        valid_len = valid_len.at[i * F:(i + 1) * F].set(L - k + 1)
    # Bias + validity mask as one additive (lc, 128) slab.
    valid = jnp.arange(lc)[:, None] < valid_len[None, :]
    bias_mask = jnp.where(valid, bias_lane[None, :], -1e9).astype(jnp.float32)

    # Lane-padded dense layer: weight (O, nf) -> (128, 128), bias (O,) -> (1, 128).
    w_dense = jnp.zeros((LANE, LANE), jnp.float32).at[:nf, :O].set(dense_w.T)
    b_dense_p = jnp.zeros((1, LANE), jnp.float32).at[0, :O].set(dense_b)

    return dict(
        emb_table=emb_table.astype(jnp.bfloat16),   # bf16 table: halves gather bytes
        w_conv=w_fused.astype(jnp.bfloat16),
        bias_mask=bias_mask,
        w_dense=w_dense,
        b_dense=b_dense_p,
    )


# ------------------------------ host wrapper ------------------------------ #
@functools.partial(jax.jit, static_argnames=("output_size", "batch_tile"))
def textcnn_forward(x_in, emb_table, w_conv, bias_mask, w_dense, b_dense, *,
                    output_size, batch_tile=64):
    B, L = x_in.shape
    E = emb_table.shape[1]
    kc, nfp = w_conv.shape                 # kc = kpad*E (contraction), nfp = 128
    lc = bias_mask.shape[0]
    kpad = kc // E
    lp = lc + kpad - 1                     # padded sequence length the im2col reads

    # Batch tile: must divide B and be 8-aligned (or equal B).  Default 64 keeps the conv
    # matmul M-dim (tb*lc) >= 256; for tiny batches this collapses to a single grid step.
    tb = min(batch_tile, B)
    if B % tb != 0 or (tb % 8 != 0 and tb != B):
        tb = B
    grid_steps = B // tb

    # 1) Embedding gather (data-dependent row lookup) stays in plain JAX glue, on the
    #    bf16 table.
    # TODO(synk): for production sizes (large vocab / long L), fuse the gather into the
    # kernel via PrefetchScalarGridSpec (x_in as scalar prefetch) + row-gather DMA instead
    # of materializing the (B, lc, kpad*E) slab in HBM.
    emb = jnp.take(emb_table, x_in, axis=0)                            # (B, L, E) bf16
    emb = jnp.pad(emb, ((0, 0), (0, lp - L), (0, 0)))
    # 2) Wrapper-side im2col: lane-dense (B, lc, kpad*E) slab; zero-padded taps line up
    #    with zero rows of the fused weight, so no in-kernel concat/shuffle is needed.
    x = jnp.concatenate([emb[:, dk:dk + lc, :] for dk in range(kpad)], axis=-1)

    kernel = _make_textcnn_kernel(tb, lc, kc, LANE)

    flops = 2 * B * lc * kc * LANE + 2 * B * LANE * LANE
    bytes_accessed = (x.size * 2 + w_conv.size * 2
                      + (bias_mask.size + w_dense.size + b_dense.size) * 4
                      + B * LANE * 4)

    const = lambda i: (0, 0)
    out_pad = pl.pallas_call(
        kernel,
        out_shape=jax.ShapeDtypeStruct((B, LANE), jnp.float32),
        grid=(grid_steps,),
        in_specs=[
            pl.BlockSpec((tb, lc, kc), lambda i: (i, 0, 0)),           # batch-tiled im2col slab
            pl.BlockSpec((kc, LANE), const, pipeline_mode=pl.Buffered(1)),    # fused conv weight
            pl.BlockSpec((lc, LANE), const, pipeline_mode=pl.Buffered(1)),    # bias + mask slab
            pl.BlockSpec((LANE, LANE), const, pipeline_mode=pl.Buffered(1)),  # padded dense weight
            pl.BlockSpec((1, LANE), const, pipeline_mode=pl.Buffered(1)),     # padded dense bias
        ],
        out_specs=pl.BlockSpec((tb, LANE), lambda i: (i, 0)),
        compiler_params=pltpu.CompilerParams(
            # Shard the batch grid across TensorCores only when there is >1 step; with a
            # single step (toy B=16) skip megacore sharding entirely.
            dimension_semantics=("parallel",) if grid_steps > 1 else ("arbitrary",),
            vmem_limit_bytes=32 * 1024 * 1024,
        ),
        cost_estimate=pl.CostEstimate(
            flops=flops, transcendentals=0, bytes_accessed=bytes_accessed),
    )(x, w_conv, bias_mask, w_dense, b_dense)

    return out_pad[:, :output_size]                                    # drop the lane padding


# --------------------------- reference (pure JAX, f32) --------------------------- #
def textcnn_reference(x_in, emb_table, conv_ws, conv_bs, dense_w, dense_b, kernel_sizes):
    emb = jnp.take(emb_table, x_in, axis=0)                            # (B, L, E)
    L = emb.shape[1]
    pooled = []
    for k, w, b in zip(kernel_sizes, conv_ws, conv_bs):                # w: (F, E, k), b: (F,)
        lout = L - k + 1
        conv = jnp.zeros((emb.shape[0], lout, w.shape[0]), jnp.float32) + b[None, None, :]
        for dk in range(k):
            conv = conv + jnp.einsum("ble,fe->blf", emb[:, dk:dk + lout, :], w[:, :, dk])
        conv = jnp.maximum(conv, 0.0)
        pooled.append(jnp.max(conv, axis=1))                           # (B, F)
    feat = jnp.concatenate(pooled, axis=-1)                            # (B, n*F)
    return feat @ dense_w.T + dense_b[None, :]


# --------------------------------- main ----------------------------------- #
if __name__ == "__main__":
    vocab_size = 64
    embedding_size = 32
    seq_len = 16
    batch = 16
    filters = 16
    kernel_sizes = (3, 4, 5)
    output_size = 8
    padding_idx = 0

    key = jax.random.PRNGKey(0)
    keys = jax.random.split(key, 4 + 2 * len(kernel_sizes))
    k_emb, k_tok, k_dw, k_db = keys[0], keys[1], keys[2], keys[3]
    k_convs = keys[4:]

    # Parameters in PyTorch layouts.
    emb_table = 0.1 * jax.random.normal(k_emb, (vocab_size, embedding_size), jnp.float32)
    emb_table = emb_table.at[padding_idx].set(0.0)                     # padding_idx row = 0

    conv_ws, conv_bs = [], []
    for i, k in enumerate(kernel_sizes):
        kw, kb = k_convs[2 * i], k_convs[2 * i + 1]
        conv_ws.append(0.1 * jax.random.normal(kw, (filters, embedding_size, k), jnp.float32))
        conv_bs.append(0.1 * jax.random.normal(kb, (filters,), jnp.float32))

    dense_in = filters * len(kernel_sizes)
    dense_w = 0.1 * jax.random.normal(k_dw, (output_size, dense_in), jnp.float32)
    dense_b = 0.1 * jax.random.normal(k_db, (output_size,), jnp.float32)

    x_in = jax.random.randint(k_tok, (batch, seq_len), 0, vocab_size, dtype=jnp.int32)

    # One-time parameter packing (hoisted out of the per-call hot path).
    packed = pack_textcnn_params(emb_table, tuple(conv_ws), tuple(conv_bs),
                                 dense_w, dense_b, kernel_sizes, seq_len)

    out = textcnn_forward(x_in, packed["emb_table"], packed["w_conv"], packed["bias_mask"],
                          packed["w_dense"], packed["b_dense"],
                          output_size=output_size, batch_tile=64)
    out = jax.block_until_ready(out)

    ref = textcnn_reference(x_in, emb_table, conv_ws, conv_bs, dense_w, dense_b, kernel_sizes)
    assert out.shape == (batch, output_size)
    # bf16 embeddings / conv weights on the MXU with f32 accumulation -> loosened tolerance.
    assert jnp.allclose(out, ref, atol=2e-2, rtol=2e-2), "Pallas output mismatch vs reference"

    print("KERNEL_OK")
</pallas_src>

<mosaic_0001>
module attributes {stable_mosaic.version = 11 : i64} {
  func.func @kernel(%arg0: i32, %arg1: memref<16x16x256xbf16, #tpu.memory_space<vmem>>, %arg2: memref<256x128xbf16, #tpu.memory_space<vmem>>, %arg3: memref<16x128xf32, #tpu.memory_space<vmem>>, %arg4: memref<128x128xf32, #tpu.memory_space<vmem>>, %arg5: memref<1x128xf32, #tpu.memory_space<vmem>>, %arg6: memref<16x128xf32, #tpu.memory_space<vmem>>) attributes {dimension_semantics = [#tpu.dimension_semantics<arbitrary>], iteration_bounds = array<i64: 1>, scalar_prefetch = 0 : i64, scratch_operands = 0 : i64, tpu.core_type = #tpu.core_type<tc>, window_params = [{transform_indices = @transform_0, window_bounds = array<i64: 16, 16, 256>}, {pipeline_mode = #tpu.pipeline_mode<synchronous>, transform_indices = @transform_1, window_bounds = array<i64: 256, 128>}, {pipeline_mode = #tpu.pipeline_mode<synchronous>, transform_indices = @transform_2, window_bounds = array<i64: 16, 128>}, {pipeline_mode = #tpu.pipeline_mode<synchronous>, transform_indices = @transform_3, window_bounds = array<i64: 128, 128>}, {pipeline_mode = #tpu.pipeline_mode<synchronous>, transform_indices = @transform_4, window_bounds = array<i64: 1, 128>}, {transform_indices = @transform_5, window_bounds = array<i64: 16, 128>}]} {
    %c0 = arith.constant 0 : index
    %c0_0 = arith.constant 0 : index
    %c0_1 = arith.constant 0 : index
    %0 = vector.load %arg1[%c0, %c0_0, %c0_1] : memref<16x16x256xbf16, #tpu.memory_space<vmem>>, vector<16x16x256xbf16>
    %1 = vector.shape_cast %0 : vector<16x16x256xbf16> to vector<256x256xbf16>
    %c0_2 = arith.constant 0 : index
    %c0_3 = arith.constant 0 : index
    %2 = vector.load %arg2[%c0_2, %c0_3] : memref<256x128xbf16, #tpu.memory_space<vmem>>, vector<256x128xbf16>
    %cst = arith.constant dense<0.000000e+00> : vector<256x128xf32>
    %3 = tpu.matmul %1, %2, %cst {dimension_numbers = #tpu.dot_dimension_numbers<[1], [0], [0], [1], [0, 0, 1, 1], [], []>} : vector<256x256xbf16>, vector<256x128xbf16>, vector<256x128xf32> -> vector<256x128xf32>
    %4 = vector.shape_cast %3 : vector<256x128xf32> to vector<16x16x128xf32>
    %c0_4 = arith.constant 0 : index
    %c0_5 = arith.constant 0 : index
    %5 = vector.load %arg3[%c0_4, %c0_5] : memref<16x128xf32, #tpu.memory_space<vmem>>, vector<16x128xf32>
    %6 = vector.shape_cast %5 : vector<16x128xf32> to vector<1x16x128xf32>
    %7 = vector.broadcast %6 : vector<1x16x128xf32> to vector<16x16x128xf32>
    %8 = arith.addf %4, %7 : vector<16x16x128xf32>
    %cst_6 = arith.constant 0.000000e+00 : f32
    %9 = vector.broadcast %cst_6 : f32 to vector<16x16x128xf32>
    %10 = arith.maximumf %8, %9 : vector<16x16x128xf32>
    %cst_7 = arith.constant dense<0xFF800000> : vector<16x128xf32>
    %11 = vector.multi_reduction <maximumf>, %10, %cst_7 [1] : vector<16x16x128xf32> to vector<16x128xf32>
    %c0_8 = arith.constant 0 : index
    %c0_9 = arith.constant 0 : index
    %12 = vector.load %arg4[%c0_8, %c0_9] : memref<128x128xf32, #tpu.memory_space<vmem>>, vector<128x128xf32>
    %cst_10 = arith.constant dense<0.000000e+00> : vector<16x128xf32>
    %13 = tpu.matmul %11, %12, %cst_10 {dimension_numbers = #tpu.dot_dimension_numbers<[1], [0], [0], [1], [0, 0, 1, 1], [], []>} : vector<16x128xf32>, vector<128x128xf32>, vector<16x128xf32> -> vector<16x128xf32>
    %c0_11 = arith.constant 0 : index
    %c0_12 = arith.constant 0 : index
    %14 = vector.load %arg5[%c0_11, %c0_12] : memref<1x128xf32, #tpu.memory_space<vmem>>, vector<1x128xf32>
    %15 = vector.broadcast %14 : vector<1x128xf32> to vector<16x128xf32>
    %16 = arith.addf %13, %15 : vector<16x128xf32>
    %c0_13 = arith.constant 0 : index
    %c0_14 = arith.constant 0 : index
    %17 = vector.load %arg6[%c0_13, %c0_14] : memref<16x128xf32, #tpu.memory_space<vmem>>, vector<16x128xf32>
    tpu.vector_store %arg6[%c0_13, %c0_14], %16 {strides = array<i32>} : memref<16x128xf32, #tpu.memory_space<vmem>>, vector<16x128xf32>,
    return
  }
  func.func @transform_0(%arg0: i32) -> (i32, i32, i32) {
    %c0_i32 = arith.constant 0 : i32
    %c0_i32_0 = arith.constant 0 : i32
    %c0_i32_1 = arith.constant 0 : i32
    return %arg0, %c0_i32, %c0_i32_0 : i32, i32, i32
  }
  func.func @transform_1(%arg0: i32) -> (i32, i32) {
    %c0_i32 = arith.constant 0 : i32
    %c0_i32_0 = arith.constant 0 : i32
    %c0_i32_1 = arith.constant 0 : i32
    return %c0_i32, %c0_i32_0 : i32, i32
  }
  func.func @transform_2(%arg0: i32) -> (i32, i32) {
    %c0_i32 = arith.constant 0 : i32
    %c0_i32_0 = arith.constant 0 : i32
    %c0_i32_1 = arith.constant 0 : i32
    return %c0_i32, %c0_i32_0 : i32, i32
  }
  func.func @transform_3(%arg0: i32) -> (i32, i32) {
    %c0_i32 = arith.constant 0 : i32
    %c0_i32_0 = arith.constant 0 : i32
    %c0_i32_1 = arith.constant 0 : i32
    return %c0_i32, %c0_i32_0 : i32, i32
  }
  func.func @transform_4(%arg0: i32) -> (i32, i32) {
    %c0_i32 = arith.constant 0 : i32
    %c0_i32_0 = arith.constant 0 : i32
    %c0_i32_1 = arith.constant 0 : i32
    return %c0_i32, %c0_i32_0 : i32, i32
  }
  func.func @transform_5(%arg0: i32) -> (i32, i32) {
    %c0_i32 = arith.constant 0 : i32
    %c0_i32_0 = arith.constant 0 : i32
    return %arg0, %c0_i32 : i32, i32
  }
}

</mosaic_0001>

<llo_original>
// kernel: textcnn_forward.1
$region0: #{textcnn_forward.1}
  #allocation0 [shape = 'u32[]', space=smem, size = 0x4, offset = 0x4, fixed_abs, tag = 'smem constant byte address 0x4 - core index']
  #allocation1 [shape = 'u32[144,128]{1,0:T(1,128)}', space=vmem, size = 0x12000, scoped, tag = 'internal scratch']
  %s0 = inlined_call_operand.vmem [shape: bf16[16,16,256], index: 0, kind: input, shape index: {}]
  %s1 = inlined_call_operand.vmem [shape: bf16[256,128], index: 1, kind: input, shape index: {}]
  %s2 = inlined_call_operand.vmem [shape: f32[16,128], index: 2, kind: input, shape index: {}]
  %s3 = inlined_call_operand.vmem [shape: f32[128,128], index: 3, kind: input, shape index: {}]
  %s4 = inlined_call_operand.vmem [shape: f32[1,128], index: 4, kind: input, shape index: {}]
  %s5 = inlined_call_operand.vmem [shape: f32[16,128], index: 5, kind: output, shape index: {}]
  %s6 = sld [smem:[#allocation0]]
  $region30: #{textcnn_forward.1} parent=0
    _
  %s8 = ssub.s32 1, %s6
  %s9 = scalar_select 0, %s8, %s6
  // Predicated region
  $region2: #{textcnn_forward.1} parent=0 // pred_check
    _
  $region3: #{textcnn_forward.1} parent=0 // pred_check_branch
    %11 = sbr.rel (0) target = $region5
  $region4: #{textcnn_forward.1} parent=0 // pred_region
    _
  $region5: #{textcnn_forward.1} parent=0 // pred_fallthru
    _
  // Predicated region
  $region6: #{textcnn_forward.1} parent=0 // pred_check
    _
  $region7: #{textcnn_forward.1} parent=0 // pred_check_branch
    %13 = sbr.rel (0) target = $region9
  $region8: #{textcnn_forward.1} parent=0 // pred_region
    _
  $region9: #{textcnn_forward.1} parent=0 // pred_fallthru
    _
  // Predicated region
  $region10: #{textcnn_forward.1} parent=0 // pred_check
    _
  $region11: #{textcnn_forward.1} parent=0 // pred_check_branch
    %15 = sbr.rel (0) target = $region13
  $region12: #{textcnn_forward.1} parent=0 // pred_region
    _
  $region13: #{textcnn_forward.1} parent=0 // pred_fallthru
    _
  // Predicated region
  $region14: #{textcnn_forward.1} parent=0 // pred_check
    _
  $region15: #{textcnn_forward.1} parent=0 // pred_check_branch
    %17 = sbr.rel (0) target = $region17
  $region16: #{textcnn_forward.1} parent=0 // pred_region
    _
  $region17: #{textcnn_forward.1} parent=0 // pred_fallthru
    _
  // Predicated region
  $region18: #{textcnn_forward.1} parent=0 // pred_check
    _
  $region19: #{textcnn_forward.1} parent=0 // pred_check_branch
    %19 = sbr.rel (0) target = $region21
  $region20: #{textcnn_forward.1} parent=0 // pred_region
    _
  $region21: #{textcnn_forward.1} parent=0 // pred_fallthru
    _
  %v21 = vld [vmem:[%s0] sm:$0xff]
  %v22 = vld [vmem:[%s0 + $0x8] sm:$0xff]
  %v23 = vld [vmem:[%s0 + $0x10] sm:$0xff]
  %v24 = vld [vmem:[%s0 + $0x18] sm:$0xff]
  %v25 = vld [vmem:[%s0 + $0x20] sm:$0xff]
  %v26 = vld [vmem:[%s0 + $0x28] sm:$0xff]
  %v27 = vld [vmem:[%s0 + $0x30] sm:$0xff]
  %v28 = vld [vmem:[%s0 + $0x38] sm:$0xff]
  %v29 = vld [vmem:[%s0 + $0x40] sm:$0xff]
  %v30 = vld [vmem:[%s0 + $0x48] sm:$0xff]
  %v31 = vld [vmem:[%s0 + $0x50] sm:$0xff]
  %v32 = vld [vmem:[%s0 + $0x58] sm:$0xff]
  %v33 = vld [vmem:[%s0 + $0x60] sm:$0xff]
  %v34 = vld [vmem:[%s0 + $0x68] sm:$0xff]
  %v35 = vld [vmem:[%s0 + $0x70] sm:$0xff]
  %v36 = vld [vmem:[%s0 + $0x78] sm:$0xff]
  %v37 = vld [vmem:[%s0 + $0x80] sm:$0xff]
  %v38 = vld [vmem:[%s0 + $0x88] sm:$0xff]
  %v39 = vld [vmem:[%s0 + $0x90] sm:$0xff]
  %v40 = vld [vmem:[%s0 + $0x98] sm:$0xff]
  %v41 = vld [vmem:[%s0 + $0xa0] sm:$0xff]
  %v42 = vld [vmem:[%s0 + $0xa8] sm:$0xff]
  %v43 = vld [vmem:[%s0 + $0xb0] sm:$0xff]
  %v44 = vld [vmem:[%s0 + $0xb8] sm:$0xff]
  %v45 = vld [vmem:[%s0 + $0xc0] sm:$0xff]
  %v46 = vld [vmem:[%s0 + $0xc8] sm:$0xff]
  %v47 = vld [vmem:[%s0 + $0xd0] sm:$0xff]
  %v48 = vld [vmem:[%s0 + $0xd8] sm:$0xff]
  %v49 = vld [vmem:[%s0 + $0xe0] sm:$0xff]
  %v50 = vld [vmem:[%s0 + $0xe8] sm:$0xff]
  %v51 = vld [vmem:[%s0 + $0xf0] sm:$0xff]
  %v52 = vld [vmem:[%s0 + $0xf8] sm:$0xff]
  %v53 = vld [vmem:[%s1] sm:$0xf]
  %v54 = vld [vmem:[%s1 + $0x4] sm:$0xf]
  %v55 = vld [vmem:[%s1 + $0x8] sm:$0xf]
  %v56 = vld [vmem:[%s1 + $0xc] sm:$0xf]
  %v57 = vld [vmem:[%s1 + $0x10] sm:$0xf]
  %v58 = vld [vmem:[%s1 + $0x14] sm:$0xf]
  %v59 = vld [vmem:[%s1 + $0x18] sm:$0xf]
  %v60 = vld [vmem:[%s1 + $0x1c] sm:$0xf]
  %v61 = vld [vmem:[%s1 + $0x20] sm:$0xf]
  %v62 = vld [vmem:[%s1 + $0x24] sm:$0xf]
  %v63 = vld [vmem:[%s1 + $0x28] sm:$0xf]
  %v64 = vld [vmem:[%s1 + $0x2c] sm:$0xf]
  %v65 = vld [vmem:[%s1 + $0x30] sm:$0xf]
  %v66 = vld [vmem:[%s1 + $0x34] sm:$0xf]
  %v67 = vld [vmem:[%s1 + $0x38] sm:$0xf]
  %v68 = vld [vmem:[%s1 + $0x3c] sm:$0xf]
  %v69 = vld [vmem:[%s1 + $0x40] sm:$0xf]
  %v70 = vld [vmem:[%s1 + $0x44] sm:$0xf]
  %v71 = vld [vmem:[%s1 + $0x48] sm:$0xf]
  %v72 = vld [vmem:[%s1 + $0x4c] sm:$0xf]
  %v73 = vld [vmem:[%s1 + $0x50] sm:$0xf]
  %v74 = vld [vmem:[%s1 + $0x54] sm:$0xf]
  %v75 = vld [vmem:[%s1 + $0x58] sm:$0xf]
  %v76 = vld [vmem:[%s1 + $0x5c] sm:$0xf]
  %v77 = vld [vmem:[%s1 + $0x60] sm:$0xf]
  %v78 = vld [vmem:[%s1 + $0x64] sm:$0xf]
  %v79 = vld [vmem:[%s1 + $0x68] sm:$0xf]
  %v80 = vld [vmem:[%s1 + $0x6c] sm:$0xf]
  %v81 = vld [vmem:[%s1 + $0x70] sm:$0xf]
  %v82 = vld [vmem:[%s1 + $0x74] sm:$0xf]
  %v83 = vld [vmem:[%s1 + $0x78] sm:$0xf]
  %v84 = vld [vmem:[%s1 + $0x7c] sm:$0xf]
  %v117 = vunpack.c.l.b16 %v21
  %v118 = vunpack.c.h.b16 %v21
  %v119 = vunpack.c.l.b16 %v22
  %v120 = vunpack.c.h.b16 %v22
  %v121 = vunpack.c.l.b16 %v23
  %v122 = vunpack.c.h.b16 %v23
  %v123 = vunpack.c.l.b16 %v24
  %v124 = vunpack.c.h.b16 %v24
  %v125 = vunpack.c.l.b16 %v25
  %v126 = vunpack.c.h.b16 %v25
  %v127 = vunpack.c.l.b16 %v26
  %v128 = vunpack.c.h.b16 %v26
  %v129 = vunpack.c.l.b16 %v27
  %v130 = vunpack.c.h.b16 %v27
  %v131 = vunpack.c.l.b16 %v28
  %v132 = vunpack.c.h.b16 %v28
  %v133 = vunpack.c.l.b16 %v29
  %v134 = vunpack.c.h.b16 %v29
  %v135 = vunpack.c.l.b16 %v30
  %v136 = vunpack.c.h.b16 %v30
  %v137 = vunpack.c.l.b16 %v31
  %v138 = vunpack.c.h.b16 %v31
  %v139 = vunpack.c.l.b16 %v32
  %v140 = vunpack.c.h.b16 %v32
  %v141 = vunpack.c.l.b16 %v33
  %v142 = vunpack.c.h.b16 %v33
  %v143 = vunpack.c.l.b16 %v34
  %v144 = vunpack.c.h.b16 %v34
  %v145 = vunpack.c.l.b16 %v35
  %v146 = vunpack.c.h.b16 %v35
  %v147 = vunpack.c.l.b16 %v36
  %v148 = vunpack.c.h.b16 %v36
  %v149 = vunpack.c.l.b16 %v37
  %v150 = vunpack.c.h.b16 %v37
  %v151 = vunpack.c.l.b16 %v38
  %v152 = vunpack.c.h.b16 %v38
  %v153 = vunpack.c.l.b16 %v39
  %v154 = vunpack.c.h.b16 %v39
  %v155 = vunpack.c.l.b16 %v40
  %v156 = vunpack.c.h.b16 %v40
  %v157 = vunpack.c.l.b16 %v41
  %v158 = vunpack.c.h.b16 %v41
  %v159 = vunpack.c.l.b16 %v42
  %v160 = vunpack.c.h.b16 %v42
  %v161 = vunpack.c.l.b16 %v43
  %v162 = vunpack.c.h.b16 %v43
  %v163 = vunpack.c.l.b16 %v44
  %v164 = vunpack.c.h.b16 %v44
  %v165 = vunpack.c.l.b16 %v45
  %v166 = vunpack.c.h.b16 %v45
  %v167 = vunpack.c.l.b16 %v46
  %v168 = vunpack.c.h.b16 %v46
  %v169 = vunpack.c.l.b16 %v47
  %v170 = vunpack.c.h.b16 %v47
  %v171 = vunpack.c.l.b16 %v48
  %v172 = vunpack.c.h.b16 %v48
  %v173 = vunpack.c.l.b16 %v49
  %v174 = vunpack.c.h.b16 %v49
  %v175 = vunpack.c.l.b16 %v50
  %v176 = vunpack.c.h.b16 %v50
  %v177 = vunpack.c.l.b16 %v51
  %v178 = vunpack.c.h.b16 %v51
  %v179 = vunpack.c.l.b16 %v52
  %v180 = vunpack.c.h.b16 %v52
  %v181 = vpack.c.b16 %v119, %v117
  %v182 = vpack.c.b16 %v120, %v118
  %v183 = vpack.c.b16 %v123, %v121
  %v184 = vpack.c.b16 %v124, %v122
  %v185 = vpack.c.b16 %v127, %v125
  %v186 = vpack.c.b16 %v128, %v126
  %v187 = vpack.c.b16 %v131, %v129
  %v188 = vpack.c.b16 %v132, %v130
  %v189 = vpack.c.b16 %v135, %v133
  %v190 = vpack.c.b16 %v136, %v134
  %v191 = vpack.c.b16 %v139, %v137
  %v192 = vpack.c.b16 %v140, %v138
  %v193 = vpack.c.b16 %v143, %v141
  %v194 = vpack.c.b16 %v144, %v142
  %v195 = vpack.c.b16 %v147, %v145
  %v196 = vpack.c.b16 %v148, %v146
  %v197 = vpack.c.b16 %v151, %v149
  %v198 = vpack.c.b16 %v152, %v150
  %v199 = vpack.c.b16 %v155, %v153
  %v200 = vpack.c.b16 %v156, %v154
  %v201 = vpack.c.b16 %v159, %v157
  %v202 = vpack.c.b16 %v160, %v158
  %v203 = vpack.c.b16 %v163, %v161
  %v204 = vpack.c.b16 %v164, %v162
  %v205 = vpack.c.b16 %v167, %v165
  %v206 = vpack.c.b16 %v168, %v166
  %v207 = vpack.c.b16 %v171, %v169
  %v208 = vpack.c.b16 %v172, %v170
  %v209 = vpack.c.b16 %v175, %v173
  %v210 = vpack.c.b16 %v176, %v174
  %v211 = vpack.c.b16 %v179, %v177
  %v212 = vpack.c.b16 %v180, %v178
  %v277 = vunpack.c.l.b16 %v53
  %v278 = vunpack.c.l.b16 %v54
  %v279 = vunpack.c.l.b16 %v55
  %v280 = vunpack.c.l.b16 %v56
  %v281 = vunpack.c.l.b16 %v57
  %v282 = vunpack.c.l.b16 %v58
  %v283 = vunpack.c.l.b16 %v59
  %v284 = vunpack.c.l.b16 %v60
  %v285 = vunpack.c.l.b16 %v61
  %v286 = vunpack.c.l.b16 %v62
  %v287 = vunpack.c.l.b16 %v63
  %v288 = vunpack.c.l.b16 %v64
  %v289 = vunpack.c.l.b16 %v65
  %v290 = vunpack.c.l.b16 %v66
  %v291 = vunpack.c.l.b16 %v67
  %v292 = vunpack.c.l.b16 %v68
  %v293 = vunpack.c.l.b16 %v69
  %v294 = vunpack.c.l.b16 %v70
  %v295 = vunpack.c.l.b16 %v71
  %v296 = vunpack.c.l.b16 %v72
  %v297 = vunpack.c.l.b16 %v73
  %v298 = vunpack.c.l.b16 %v74
  %v299 = vunpack.c.l.b16 %v75
  %v300 = vunpack.c.l.b16 %v76
  %v301 = vunpack.c.l.b16 %v77
  %v302 = vunpack.c.l.b16 %v78
  %v303 = vunpack.c.l.b16 %v79
  %v304 = vunpack.c.l.b16 %v80
  %v305 = vunpack.c.l.b16 %v81
  %v306 = vunpack.c.l.b16 %v82
  %v307 = vunpack.c.l.b16 %v83
  %v308 = vunpack.c.l.b16 %v84
  %v309 = vpack.c.b16 %v278, %v277
  %v310 = vpack.c.b16 %v280, %v279
  %v311 = vpack.c.b16 %v282, %v281
  %v312 = vpack.c.b16 %v284, %v283
  %v313 = vpack.c.b16 %v286, %v285
  %v314 = vpack.c.b16 %v288, %v287
  %v315 = vpack.c.b16 %v290, %v289
  %v316 = vpack.c.b16 %v292, %v291
  %v317 = vpack.c.b16 %v294, %v293
  %v318 = vpack.c.b16 %v296, %v295
  %v319 = vpack.c.b16 %v298, %v297
  %v320 = vpack.c.b16 %v300, %v299
  %v321 = vpack.c.b16 %v302, %v301
  %v322 = vpack.c.b16 %v304, %v303
  %v323 = vpack.c.b16 %v306, %v305
  %v324 = vpack.c.b16 %v308, %v307
  %341 = vmatprep.subr.bf16.mxu0 0
  %342 = vmatpush1.bf16.msra.mxu0 %v309
  %343 = vmatprep.subr.bf16.mxu0 0
  %344 = vmatpush1.bf16.msra.mxu0 %v310
  %345 = vmatprep.subr.bf16.mxu0 0
  %346 = vmatpush1.bf16.msra.mxu0 %v311
  %347 = vmatprep.subr.bf16.mxu0 0
  %348 = vmatpush1.bf16.msra.mxu0 %v312
  %349 = vmatprep.subr.bf16.mxu0 0
  %350 = vmatpush1.bf16.msra.mxu0 %v313
  %351 = vmatprep.subr.bf16.mxu0 0
  %352 = vmatpush1.bf16.msra.mxu0 %v314
  %353 = vmatprep.subr.bf16.mxu0 0
  %354 = vmatpush1.bf16.msra.mxu0 %v315
  %355 = vmatprep.subr.bf16.mxu0 0
  %356 = vmatpush1.bf16.msra.mxu0 %v316
  %357 = vmatprep.subr.bf16.mxu0 0
  %358 = vmatpush1.bf16.msra.mxu0 %v317
  %359 = vmatprep.subr.bf16.mxu0 0
  %360 = vmatpush1.bf16.msra.mxu0 %v318
  %361 = vmatprep.subr.bf16.mxu0 0
  %362 = vmatpush1.bf16.msra.mxu0 %v319
  %363 = vmatprep.subr.bf16.mxu0 0
  %364 = vmatpush1.bf16.msra.mxu0 %v320
  %365 = vmatprep.subr.bf16.mxu0 0
  %366 = vmatpush1.bf16.msra.mxu0 %v321
  %367 = vmatprep.subr.bf16.mxu0 0
  %368 = vmatpush1.bf16.msra.mxu0 %v322
  %369 = vmatprep.subr.bf16.mxu0 0
  %370 = vmatpush1.bf16.msra.mxu0 %v323
  %371 = vmatprep.subr.bf16.mxu0 0
  %372 = vmatpush1.bf16.msra.mxu0 %v324
  %373 = vmatprep.mubr.bf16.mxu0 %v182
  %374 = vmatmul.mubr.bf16.gmra.mrb[0].mxu0 %v181
  %v375 = vpop.f32.mrb[0].mxu0
  %v376 = vadd.f32 0.0, %v375
  %v377 = vpop.f32.mrb[0].mxu0
  %v378 = vpop.f32.mrb[0].mxu0
  %v379 = vadd.f32 0.0, %v378
  %v380 = vpop.f32.mrb[0].mxu0
  %381 = vmatprep.mubr.bf16.mxu0 %v184
  %382 = vmatmul.mubr.bf16.gmra.mrb[0].mxu0 %v183
  %v383 = vpop.f32.mrb[0].mxu0
  %v384 = vadd.f32 0.0, %v383
  %v385 = vpop.f32.mrb[0].mxu0
  %v386 = vpop.f32.mrb[0].mxu0
  %v387 = vadd.f32 0.0, %v386
  %v388 = vpop.f32.mrb[0].mxu0
  %389 = vmatprep.mubr.bf16.mxu0 %v186
  %390 = vmatmul.mubr.bf16.gmra.mrb[0].mxu0 %v185
  %v391 = vpop.f32.mrb[0].mxu0
  %v392 = vadd.f32 0.0, %v391
  %v393 = vpop.f32.mrb[0].mxu0
  %v394 = vpop.f32.mrb[0].mxu0
  %v395 = vadd.f32 0.0, %v394
  %v396 = vpop.f32.mrb[0].mxu0
  %397 = vmatprep.mubr.bf16.mxu0 %v188
  %398 = vmatmul.mubr.bf16.gmra.mrb[0].mxu0 %v187
  %v399 = vpop.f32.mrb[0].mxu0
  %v400 = vadd.f32 0.0, %v399
  %v401 = vpop.f32.mrb[0].mxu0
  %v402 = vpop.f32.mrb[0].mxu0
  %v403 = vadd.f32 0.0, %v402
  %v404 = vpop.f32.mrb[0].mxu0
  %405 = vmatprep.mubr.bf16.mxu0 %v190
  %406 = vmatmul.mubr.bf16.gmra.mrb[0].mxu0 %v189
  %v407 = vpop.f32.mrb[0].mxu0
  %v408 = vadd.f32 0.0, %v407
  %v409 = vpop.f32.mrb[0].mxu0
  %v410 = vpop.f32.mrb[0].mxu0
  %v411 = vadd.f32 0.0, %v410
  %v412 = vpop.f32.mrb[0].mxu0
  %413 = vmatprep.mubr.bf16.mxu0 %v192
  %414 = vmatmul.mubr.bf16.gmra.mrb[0].mxu0 %v191
  %v415 = vpop.f32.mrb[0].mxu0
  %v416 = vadd.f32 0.0, %v415
  %v417 = vpop.f32.mrb[0].mxu0
  %v418 = vpop.f32.mrb[0].mxu0
  %v419 = vadd.f32 0.0, %v418
  %v420 = vpop.f32.mrb[0].mxu0
  %421 = vmatprep.mubr.bf16.mxu0 %v194
  %422 = vmatmul.mubr.bf16.gmra.mrb[0].mxu0 %v193
  %v423 = vpop.f32.mrb[0].mxu0
  %v424 = vadd.f32 0.0, %v423
  %v425 = vpop.f32.mrb[0].mxu0
  %v426 = vpop.f32.mrb[0].mxu0
  %v427 = vadd.f32 0.0, %v426
  %v428 = vpop.f32.mrb[0].mxu0
  %429 = vmatprep.mubr.bf16.mxu0 %v196
  %430 = vmatmul.mubr.bf16.gmra.mrb[0].mxu0 %v195
  %v431 = vpop.f32.mrb[0].mxu0
  %v432 = vadd.f32 0.0, %v431
  %v433 = vpop.f32.mrb[0].mxu0
  %v434 = vpop.f32.mrb[0].mxu0
  %v435 = vadd.f32 0.0, %v434
  %v436 = vpop.f32.mrb[0].mxu0
  %437 = vmatprep.mubr.bf16.mxu0 %v198
  %438 = vmatmul.mubr.bf16.gmra.mrb[0].mxu0 %v197
  %v439 = vpop.f32.mrb[0].mxu0
  %v440 = vadd.f32 0.0, %v439
  %v441 = vpop.f32.mrb[0].mxu0
  %v442 = vpop.f32.mrb[0].mxu0
  %v443 = vadd.f32 0.0, %v442
  %v444 = vpop.f32.mrb[0].mxu0
  %445 = vmatprep.mubr.bf16.mxu0 %v200
  %446 = vmatmul.mubr.bf16.gmra.mrb[0].mxu0 %v199
  %v447 = vpop.f32.mrb[0].mxu0
  %v448 = vadd.f32 0.0, %v447
  %v449 = vpop.f32.mrb[0].mxu0
  %v450 = vpop.f32.mrb[0].mxu0
  %v451 = vadd.f32 0.0, %v450
  %v452 = vpop.f32.mrb[0].mxu0
  %453 = vmatprep.mubr.bf16.mxu0 %v202
  %454 = vmatmul.mubr.bf16.gmra.mrb[0].mxu0 %v201
  %v455 = vpop.f32.mrb[0].mxu0
  %v456 = vadd.f32 0.0, %v455
  %v457 = vpop.f32.mrb[0].mxu0
  %v458 = vpop.f32.mrb[0].mxu0
  %v459 = vadd.f32 0.0, %v458
  %v460 = vpop.f32.mrb[0].mxu0
  %461 = vmatprep.mubr.bf16.mxu0 %v204
  %462 = vmatmul.mubr.bf16.gmra.mrb[0].mxu0 %v203
  %v463 = vpop.f32.mrb[0].mxu0
  %v464 = vadd.f32 0.0, %v463
  %v465 = vpop.f32.mrb[0].mxu0
  %v466 = vpop.f32.mrb[0].mxu0
  %v467 = vadd.f32 0.0, %v466
  %v468 = vpop.f32.mrb[0].mxu0
  %469 = vmatprep.mubr.bf16.mxu0 %v206
  %470 = vmatmul.mubr.bf16.gmra.mrb[0].mxu0 %v205
  %v471 = vpop.f32.mrb[0].mxu0
  %v472 = vadd.f32 0.0, %v471
  %v473 = vpop.f32.mrb[0].mxu0
  %v474 = vpop.f32.mrb[0].mxu0
  %v475 = vadd.f32 0.0, %v474
  %v476 = vpop.f32.mrb[0].mxu0
  %477 = vmatprep.mubr.bf16.mxu0 %v208
  %478 = vmatmul.mubr.bf16.gmra.mrb[0].mxu0 %v207
  %v479 = vpop.f32.mrb[0].mxu0
  %v480 = vadd.f32 0.0, %v479
  %v481 = vpop.f32.mrb[0].mxu0
  %v482 = vpop.f32.mrb[0].mxu0
  %v483 = vadd.f32 0.0, %v482
  %v484 = vpop.f32.mrb[0].mxu0
  %485 = vmatprep.mubr.bf16.mxu0 %v210
  %486 = vmatmul.mubr.bf16.gmra.mrb[0].mxu0 %v209
  %v487 = vpop.f32.mrb[0].mxu0
  %v488 = vadd.f32 0.0, %v487
  %v489 = vpop.f32.mrb[0].mxu0
  %v490 = vpop.f32.mrb[0].mxu0
  %v491 = vadd.f32 0.0, %v490
  %v492 = vpop.f32.mrb[0].mxu0
  %493 = vmatprep.mubr.bf16.mxu0 %v212
  %494 = vmatmul.mubr.bf16.gmra.mrb[0].mxu0 %v211
  %v495 = vpop.f32.mrb[0].mxu0
  %v496 = vadd.f32 0.0, %v495
  %v497 = vpop.f32.mrb[0].mxu0
  %v498 = vpop.f32.mrb[0].mxu0
  %v499 = vadd.f32 0.0, %v498
  %v500 = vpop.f32.mrb[0].mxu0
  %501 = vdwg.mxu0
  %v502 = vld [vmem:[%s2] sm:$0xff]
  %v503 = vld [vmem:[%s2 + $0x8] sm:$0xff]
  %v504 = vadd.f32 %v376, %v502
  %v505 = vadd.f32 %v379, %v503
  %v506 = vadd.f32 %v384, %v502
  %v507 = vadd.f32 %v387, %v503
  %v508 = vadd.f32 %v392, %v502
  %v509 = vadd.f32 %v395, %v503
  %v510 = vadd.f32 %v400, %v502
  %v511 = vadd.f32 %v403, %v503
  %v512 = vadd.f32 %v408, %v502
  %v513 = vadd.f32 %v411, %v503
  %v514 = vadd.f32 %v416, %v502
  %v515 = vadd.f32 %v419, %v503
  %v516 = vadd.f32 %v424, %v502
  %v517 = vadd.f32 %v427, %v503
  %v518 = vadd.f32 %v432, %v502
  %v519 = vadd.f32 %v435, %v503
  %v520 = vadd.f32 %v440, %v502
  %v521 = vadd.f32 %v443, %v503
  %v522 = vadd.f32 %v448, %v502
  %v523 = vadd.f32 %v451, %v503
  %v524 = vadd.f32 %v456, %v502
  %v525 = vadd.f32 %v459, %v503
  %v526 = vadd.f32 %v464, %v502
  %v527 = vadd.f32 %v467, %v503
  %v528 = vadd.f32 %v472, %v502
  %v529 = vadd.f32 %v475, %v503
  %v530 = vadd.f32 %v480, %v502
  %v531 = vadd.f32 %v483, %v503
  %v532 = vadd.f32 %v488, %v502
  %v533 = vadd.f32 %v491, %v503
  %v534 = vadd.f32 %v496, %v502
  %v535 = vadd.f32 %v499, %v503
  %v536 = vmax.f32 %v504, 0.0
  %v537 = vmax.f32 %v505, 0.0
  %v538 = vmax.f32 %v506, 0.0
  %v539 = vmax.f32 %v507, 0.0
  %v540 = vmax.f32 %v508, 0.0
  %v541 = vmax.f32 %v509, 0.0
  %v542 = vmax.f32 %v510, 0.0
  %v543 = vmax.f32 %v511, 0.0
  %v544 = vmax.f32 %v512, 0.0
  %v545 = vmax.f32 %v513, 0.0
  %v546 = vmax.f32 %v514, 0.0
  %v547 = vmax.f32 %v515, 0.0
  %v548 = vmax.f32 %v516, 0.0
  %v549 = vmax.f32 %v517, 0.0
  %v550 = vmax.f32 %v518, 0.0
  %v551 = vmax.f32 %v519, 0.0
  %v552 = vmax.f32 %v520, 0.0
  %v553 = vmax.f32 %v521, 0.0
  %v554 = vmax.f32 %v522, 0.0
  %v555 = vmax.f32 %v523, 0.0
  %v556 = vmax.f32 %v524, 0.0
  %v557 = vmax.f32 %v525, 0.0
  %v558 = vmax.f32 %v526, 0.0
  %v559 = vmax.f32 %v527, 0.0
  %v560 = vmax.f32 %v528, 0.0
  %v561 = vmax.f32 %v529, 0.0
  %v562 = vmax.f32 %v530, 0.0
  %v563 = vmax.f32 %v531, 0.0
  %v564 = vmax.f32 %v532, 0.0
  %v565 = vmax.f32 %v533, 0.0
  %v566 = vmax.f32 %v534, 0.0
  %v567 = vmax.f32 %v535, 0.0
  %v568 = vmax.f32 %v536, %v537
  %v569 = vrot.slane %v568, 4
  %v570 = vmax.f32 %v568, %v569
  %v571 = vrot.slane %v570, 2
  %v572 = vmax.f32 %v570, %v571
  %v573 = vrot.slane %v572, 1
  %v574 = vmax.f32 %v572, %v573
  %v575 = vmax.f32 %v538, %v539
  %v576 = vrot.slane %v575, 4
  %v577 = vmax.f32 %v575, %v576
  %v578 = vrot.slane %v577, 2
  %v579 = vmax.f32 %v577, %v578
  %v580 = vrot.slane %v579, 1
  %v581 = vmax.f32 %v579, %v580
  %v582 = vmax.f32 %v540, %v541
  %v583 = vrot.slane %v582, 4
  %v584 = vmax.f32 %v582, %v583
  %v585 = vrot.slane %v584, 2
  %v586 = vmax.f32 %v584, %v585
  %v587 = vrot.slane %v586, 1
  %v588 = vmax.f32 %v586, %v587
  %v589 = vmax.f32 %v542, %v543
  %v590 = vrot.slane %v589, 4
  %v591 = vmax.f32 %v589, %v590
  %v592 = vrot.slane %v591, 2
  %v593 = vmax.f32 %v591, %v592
  %v594 = vrot.slane %v593, 1
  %v595 = vmax.f32 %v593, %v594
  %v596 = vmax.f32 %v544, %v545
  %v597 = vrot.slane %v596, 4
  %v598 = vmax.f32 %v596, %v597
  %v599 = vrot.slane %v598, 2
  %v600 = vmax.f32 %v598, %v599
  %v601 = vrot.slane %v600, 1
  %v602 = vmax.f32 %v600, %v601
  %v603 = vmax.f32 %v546, %v547
  %v604 = vrot.slane %v603, 4
  %v605 = vmax.f32 %v603, %v604
  %v606 = vrot.slane %v605, 2
  %v607 = vmax.f32 %v605, %v606
  %v608 = vrot.slane %v607, 1
  %v609 = vmax.f32 %v607, %v608
  %v610 = vmax.f32 %v548, %v549
  %v611 = vrot.slane %v610, 4
  %v612 = vmax.f32 %v610, %v611
  %v613 = vrot.slane %v612, 2
  %v614 = vmax.f32 %v612, %v613
  %v615 = vrot.slane %v614, 1
  %v616 = vmax.f32 %v614, %v615
  %v617 = vmax.f32 %v550, %v551
  %v618 = vrot.slane %v617, 4
  %v619 = vmax.f32 %v617, %v618
  %v620 = vrot.slane %v619, 2
  %v621 = vmax.f32 %v619, %v620
  %v622 = vrot.slane %v621, 1
  %v623 = vmax.f32 %v621, %v622
  %v624 = vmax.f32 %v552, %v553
  %v625 = vrot.slane %v624, 4
  %v626 = vmax.f32 %v624, %v625
  %v627 = vrot.slane %v626, 2
  %v628 = vmax.f32 %v626, %v627
  %v629 = vrot.slane %v628, 1
  %v630 = vmax.f32 %v628, %v629
  %v631 = vmax.f32 %v554, %v555
  %v632 = vrot.slane %v631, 4
  %v633 = vmax.f32 %v631, %v632
  %v634 = vrot.slane %v633, 2
  %v635 = vmax.f32 %v633, %v634
  %v636 = vrot.slane %v635, 1
  %v637 = vmax.f32 %v635, %v636
  %v638 = vmax.f32 %v556, %v557
  %v639 = vrot.slane %v638, 4
  %v640 = vmax.f32 %v638, %v639
  %v641 = vrot.slane %v640, 2
  %v642 = vmax.f32 %v640, %v641
  %v643 = vrot.slane %v642, 1
  %v644 = vmax.f32 %v642, %v643
  %v645 = vmax.f32 %v558, %v559
  %v646 = vrot.slane %v645, 4
  %v647 = vmax.f32 %v645, %v646
  %v648 = vrot.slane %v647, 2
  %v649 = vmax.f32 %v647, %v648
  %v650 = vrot.slane %v649, 1
  %v651 = vmax.f32 %v649, %v650
  %v652 = vmax.f32 %v560, %v561
  %v653 = vrot.slane %v652, 4
  %v654 = vmax.f32 %v652, %v653
  %v655 = vrot.slane %v654, 2
  %v656 = vmax.f32 %v654, %v655
  %v657 = vrot.slane %v656, 1
  %v658 = vmax.f32 %v656, %v657
  %v659 = vmax.f32 %v562, %v563
  %v660 = vrot.slane %v659, 4
  %v661 = vmax.f32 %v659, %v660
  %v662 = vrot.slane %v661, 2
  %v663 = vmax.f32 %v661, %v662
  %v664 = vrot.slane %v663, 1
  %v665 = vmax.f32 %v663, %v664
  %v666 = vmax.f32 %v564, %v565
  %v667 = vrot.slane %v666, 4
  %v668 = vmax.f32 %v666, %v667
  %v669 = vrot.slane %v668, 2
  %v670 = vmax.f32 %v668, %v669
  %v671 = vrot.slane %v670, 1
  %v672 = vmax.f32 %v670, %v671
  %v673 = vmax.f32 %v566, %v567
  %v674 = vrot.slane %v673, 4
  %v675 = vmax.f32 %v673, %v674
  %v676 = vrot.slane %v675, 2
  %v677 = vmax.f32 %v675, %v676
  %v678 = vrot.slane %v677, 1
  %v679 = vmax.f32 %v677, %v678
  %v680 = vld [vmem:[%s3] sm:$0xff]
  %v681 = vld [vmem:[%s3 + $0x8] sm:$0xff]
  %v682 = vld [vmem:[%s3 + $0x10] sm:$0xff]
  %v683 = vld [vmem:[%s3 + $0x18] sm:$0xff]
  %v684 = vld [vmem:[%s3 + $0x20] sm:$0xff]
  %v685 = vld [vmem:[%s3 + $0x28] sm:$0xff]
  %v686 = vld [vmem:[%s3 + $0x30] sm:$0xff]
  %v687 = vld [vmem:[%s3 + $0x38] sm:$0xff]
  %v688 = vld [vmem:[%s3 + $0x40] sm:$0xff]
  %v689 = vld [vmem:[%s3 + $0x48] sm:$0xff]
  %v690 = vld [vmem:[%s3 + $0x50] sm:$0xff]
  %v691 = vld [vmem:[%s3 + $0x58] sm:$0xff]
  %v692 = vld [vmem:[%s3 + $0x60] sm:$0xff]
  %v693 = vld [vmem:[%s3 + $0x68] sm:$0xff]
  %v694 = vld [vmem:[%s3 + $0x70] sm:$0xff]
  %v695 = vld [vmem:[%s3 + $0x78] sm:$0xff]
  %v696 = vld [vmem:[%s4] sm:$0x1]
  %v698 = vlaneseq
  %v699 = vshrl.u32 %v698, 7
  %v700 = vsub.s32 0, %v699
  %v701 = vrot.slane %v696, %v700
  %vm719 = vcmask 1041409
  %v720 = vsel %vm719, %v581, %v574
  %vm721 = vcmask 1042434
  %v722 = vsel %vm721, %v588, %v720
  %vm723 = vcmask 1043459
  %v724 = vsel %vm723, %v595, %v722
  %vm725 = vcmask 1044484
  %v726 = vsel %vm725, %v602, %v724
  %vm727 = vcmask 1045509
  %v728 = vsel %vm727, %v609, %v726
  %vm729 = vcmask 1046534
  %v730 = vsel %vm729, %v616, %v728
  %vm731 = vcmask 1047559
  %v732 = vsel %vm731, %v623, %v730
  %v733 = vsel %vm719, %v637, %v630
  %v734 = vsel %vm721, %v644, %v733
  %v735 = vsel %vm723, %v651, %v734
  %v736 = vsel %vm725, %v658, %v735
  %v737 = vsel %vm727, %v665, %v736
  %v738 = vsel %vm729, %v672, %v737
  %v739 = vsel %vm731, %v679, %v738
  %742 = vmatprep.subr.mxu0 0.0
  %743 = vmatpush1.msra.mxu0 %v680
  %744 = vmatprep.subr.mxu0 0.0
  %745 = vmatpush1.msra.mxu0 %v681
  %746 = vmatprep.subr.mxu0 0.0
  %747 = vmatpush1.msra.mxu0 %v682
  %748 = vmatprep.subr.mxu0 0.0
  %749 = vmatpush1.msra.mxu0 %v683
  %750 = vmatprep.subr.mxu0 0.0
  %751 = vmatpush1.msra.mxu0 %v684
  %752 = vmatprep.subr.mxu0 0.0
  %753 = vmatpush1.msra.mxu0 %v685
  %754 = vmatprep.subr.mxu0 0.0
  %755 = vmatpush1.msra.mxu0 %v686
  %756 = vmatprep.subr.mxu0 0.0
  %757 = vmatpush1.msra.mxu0 %v687
  %758 = vmatprep.subr.mxu0 0.0
  %759 = vmatpush1.msra.mxu0 %v688
  %760 = vmatprep.subr.mxu0 0.0
  %761 = vmatpush1.msra.mxu0 %v689
  %762 = vmatprep.subr.mxu0 0.0
  %763 = vmatpush1.msra.mxu0 %v690
  %764 = vmatprep.subr.mxu0 0.0
  %765 = vmatpush1.msra.mxu0 %v691
  %766 = vmatprep.subr.mxu0 0.0
  %767 = vmatpush1.msra.mxu0 %v692
  %768 = vmatprep.subr.mxu0 0.0
  %769 = vmatpush1.msra.mxu0 %v693
  %770 = vmatprep.subr.mxu0 0.0
  %771 = vmatpush1.msra.mxu0 %v694
  %772 = vmatprep.subr.mxu0 0.0
  %773 = vmatpush1.msra.mxu0 %v695
  %774 = vmatprep.subr.mxu0 0.0
  %775 = vmatpush1.msra.mxu0 0.0
  %776 = vmatprep.subr.mxu0 0.0
  %777 = vmatpush1.msra.mxu0 0.0
  %778 = vmatprep.subr.mxu0 0.0
  %779 = vmatpush1.msra.mxu0 0.0
  %780 = vmatprep.subr.mxu0 0.0
  %781 = vmatpush1.msra.mxu0 0.0
  %782 = vmatprep.subr.mxu0 0.0
  %783 = vmatpush1.msra.mxu0 0.0
  %784 = vmatprep.subr.mxu0 0.0
  %785 = vmatpush1.msra.mxu0 0.0
  %786 = vmatprep.subr.mxu0 0.0
  %787 = vmatpush1.msra.mxu0 0.0
  %788 = vmatprep.subr.mxu0 0.0
  %789 = vmatpush1.msra.mxu0 0.0
  %790 = vmatprep.subr.mxu0 0.0
  %791 = vmatpush1.msra.mxu0 0.0
  %792 = vmatprep.subr.mxu0 0.0
  %793 = vmatpush1.msra.mxu0 0.0
  %794 = vmatprep.subr.mxu0 0.0
  %795 = vmatpush1.msra.mxu0 0.0
  %796 = vmatprep.subr.mxu0 0.0
  %797 = vmatpush1.msra.mxu0 0.0
  %798 = vmatprep.subr.mxu0 0.0
  %799 = vmatpush1.msra.mxu0 0.0
  %800 = vmatprep.subr.mxu0 0.0
  %801 = vmatpush1.msra.mxu0 0.0
  %802 = vmatprep.subr.mxu0 0.0
  %803 = vmatpush1.msra.mxu0 0.0
  %804 = vmatprep.subr.mxu0 0.0
  %805 = vmatpush1.msra.mxu0 0.0
  %806 = vmatprep.mubr.f32.mxu0 0.0
  %807 = vmatmul.mubr.f32.gmra.mrb[0].mxu0 %v732
  %v808 = vpop.f32.mrb[0].mxu0
  %v809 = vadd.f32 %v701, %v808
  %v810 = vpop.f32.mrb[0].mxu0
  %811 = vmatprep.mubr.f32.mxu0 0.0
  %812 = vmatmul.mubr.f32.gmra.mrb[0].mxu0 %v739
  %v813 = vpop.f32.mrb[0].mxu0
  %v814 = vadd.f32 %v701, %v813
  %v815 = vpop.f32.mrb[0].mxu0
  %816 = vdwg.mxu0
  %817 = vst [vmem:[%s5] sm:$0xff] %v809
  %818 = vst [vmem:[%s5 + $0x8] sm:$0xff] %v814
  // Predicated region
  $region22: #{textcnn_forward.1} parent=0 // pred_check
    _
  $region23: #{textcnn_forward.1} parent=0 // pred_check_branch
    %820 = sbr.rel (0) target = $region25
  $region24: #{textcnn_forward.1} parent=0 // pred_region
    _
  $region25: #{textcnn_forward.1} parent=0 // pred_fallthru
    _
  // Predicated region
  $region26: #{textcnn_forward.1} parent=0 // pred_check
    _
  $region27: #{textcnn_forward.1} parent=0 // pred_check_branch
    %822 = sbr.rel (0) target = $region29
  $region28: #{textcnn_forward.1} parent=0 // pred_region
    _
  $region29: #{textcnn_forward.1} parent=0 // pred_fallthru
    _

</llo_original>
